<compile_context>
chip_gen: v7x
topology: tpu7x:2x2x1
jax: 0.10.0
libtpu: 0.0.40
codegen_flags: <defaults>
</compile_context>

<pallas_src>
import jax
import jax.numpy as jnp
from jax.experimental import pallas as pl
from jax.experimental.pallas import tpu as pltpu


def _critic_kernel(x_ref, a_ref, w1x_ref, w1a_ref, w2_ref, pslab_ref, q_ref):
    H2 = w2_ref.shape[0]          # 2 * hidden_dims (both heads fused on lanes)
    H = H2 // 2

    pv = pslab_ref[...]                       # [6, 2H] packed small params
    b1 = pv[0:1]                              # [1, 2H] layer-1 bias
    gamma = pv[1:2]                           # [1, 2H] LayerNorm weight
    beta = pv[2:3]                            # [1, 2H] LayerNorm bias
    b2 = pv[3:4]                              # [1, 2H] layer-2 bias
    w3_row = pv[4:5]                          # [1, 2H] (w3a^T | w3b^T)
    b3 = pv[5:6, 0:2]                         # [1, 2]  (b3a, b3b)

    # Head-segment matrices built from iota (no extra operand, no transpose):
    #   seg   [2H, 2]: seg[i, j] = 1 iff lane i belongs to head j
    #   seg_t [2, 2H]: transpose, used to broadcast per-head stats back.
    head_of_lane = (jax.lax.broadcasted_iota(jnp.int32, (H2, 2), 0) >= H
                    ).astype(jnp.int32)
    col = jax.lax.broadcasted_iota(jnp.int32, (H2, 2), 1)
    seg = (head_of_lane == col).astype(jnp.float32)
    head_of_lane_t = (jax.lax.broadcasted_iota(jnp.int32, (2, H2), 1) >= H
                      ).astype(jnp.int32)
    row_t = jax.lax.broadcasted_iota(jnp.int32, (2, H2), 0)
    seg_t = (head_of_lane_t == row_t).astype(jnp.float32)

    # Layer 1 (both heads fused along lanes): [B, 2H].  No x/a concat needed.
    h = (jnp.dot(x_ref[...], w1x_ref[...], preferred_element_type=jnp.float32)
         + jnp.dot(a_ref[...], w1a_ref[...], preferred_element_type=jnp.float32)
         + b1)

    # Per-head LayerNorm (eps = 1e-5, biased variance) via MXU segment sums.
    inv_h = jnp.float32(1.0 / H)
    mu = jnp.dot(h, seg, preferred_element_type=jnp.float32) * inv_h       # [B, 2]
    d = h - jnp.dot(mu, seg_t, preferred_element_type=jnp.float32)         # [B, 2H]
    var = jnp.dot(d * d, seg, preferred_element_type=jnp.float32) * inv_h  # [B, 2]
    inv_std = jax.lax.rsqrt(var + 1e-5)
    h = d * jnp.dot(inv_std, seg_t, preferred_element_type=jnp.float32)
    h = jnp.tanh(h * gamma + beta)

    # Layer 2 (block-diagonal fused weights) + ELU(alpha = 1).
    h = jnp.dot(h, w2_ref[...], preferred_element_type=jnp.float32) + b2
    h = jnp.where(h > 0, h, jnp.exp(jnp.minimum(h, 0.0)) - 1.0)

    # Layer 3: per-head dot product -> single lane-packed [B, 2] output.
    q_ref[...] = jnp.dot(h * w3_row, seg,
                         preferred_element_type=jnp.float32) + b3


def pack_critic_params(params, latent_dims):
    """Fuse the twin-head parameters into a few wide slabs (done ONCE, outside
    the hot path): layer-1 weights split by input (x vs a) and concatenated
    over heads, layer-2 as a block-diagonal [2H, 2H] slab, and all small
    params (b1, gamma, beta, b2, w3, b3) stacked into one [6, 2H] slab."""
    w1a, b1a, g1a, be1a, w2a, b2a, w3a, b3a = params["q1"]
    w1b, b1b, g1b, be1b, w2b, b2b, w3b, b3b = params["q2"]
    H = w1a.shape[1]

    w1x_slab = jnp.concatenate([w1a[:latent_dims], w1b[:latent_dims]], axis=1)
    w1a_slab = jnp.concatenate([w1a[latent_dims:], w1b[latent_dims:]], axis=1)

    z = jnp.zeros((H, H), jnp.float32)
    w2_slab = jnp.concatenate(
        [jnp.concatenate([w2a, z], axis=1),
         jnp.concatenate([z, w2b], axis=1)], axis=0)            # [2H, 2H]

    b3_row = jnp.pad(jnp.concatenate([b3a, b3b], axis=1),
                     ((0, 0), (0, 2 * H - 2)))                  # [1, 2H]
    pslab = jnp.concatenate([
        jnp.concatenate([b1a, b1b], axis=1),                    # row 0: bias 1
        jnp.concatenate([g1a, g1b], axis=1),                    # row 1: LN gamma
        jnp.concatenate([be1a, be1b], axis=1),                  # row 2: LN beta
        jnp.concatenate([b2a, b2b], axis=1),                    # row 3: bias 2
        jnp.concatenate([w3a.T, w3b.T], axis=1),                # row 4: w3 rows
        b3_row,                                                 # row 5: b3 (padded)
    ], axis=0)                                                  # [6, 2H]

    return {"w1x": w1x_slab, "w1a": w1a_slab, "w2": w2_slab, "pslab": pslab}


@jax.jit
def critic_forward(x, a, packed):
    B = x.shape[0]
    vmem = pl.BlockSpec(memory_space=pltpu.MemorySpace.VMEM)
    q = pl.pallas_call(
        _critic_kernel,
        out_shape=jax.ShapeDtypeStruct((B, 2), jnp.float32),
        in_specs=[vmem] * 6,
        out_specs=vmem,
    )(x, a, packed["w1x"], packed["w1a"], packed["w2"], packed["pslab"])
    return q[:, 0:1], q[:, 1:2]


def init_critic_params(key, latent_dims, hidden_dims, action_shape):
    """Deterministic synthetic init (stand-in for utils.weight_init)."""
    d_in = latent_dims + action_shape

    def linear(key, fan_in, fan_out):
        kw, _ = jax.random.split(key)
        scale = 1.0 / jnp.sqrt(jnp.float32(fan_in))
        w = jax.random.normal(kw, (fan_in, fan_out), jnp.float32) * scale
        b = jnp.zeros((1, fan_out), jnp.float32)
        return w, b

    def head(key):
        k1, k2, k3 = jax.random.split(key, 3)
        w1, b1 = linear(k1, d_in, hidden_dims)
        gamma = jnp.ones((1, hidden_dims), jnp.float32)
        beta = jnp.zeros((1, hidden_dims), jnp.float32)
        w2, b2 = linear(k2, hidden_dims, hidden_dims)
        w3, b3 = linear(k3, hidden_dims, 1)
        return (w1, b1, gamma, beta, w2, b2, w3, b3)

    kq1, kq2 = jax.random.split(key)
    return {"q1": head(kq1), "q2": head(kq2)}


def _reference_forward(x, a, params):
    """Pure-JAX reference (mirrors the PyTorch module) for sanity checking."""
    x_a = jnp.concatenate([x, a], axis=-1)

    def head(p):
        w1, b1, g, be, w2, b2, w3, b3 = p
        h = x_a @ w1 + b1
        mu = jnp.mean(h, -1, keepdims=True)
        var = jnp.mean(jnp.square(h - mu), -1, keepdims=True)
        h = (h - mu) / jnp.sqrt(var + 1e-5) * g + be
        h = jnp.tanh(h)
        h = h @ w2 + b2
        h = jnp.where(h > 0, h, jnp.expm1(h))
        return h @ w3 + b3

    return head(params["q1"]), head(params["q2"])


if __name__ == "__main__":
    latent_dims, action_shape, hidden_dims, batch = 24, 8, 32, 8

    key = jax.random.PRNGKey(0)
    kx, ka, kp = jax.random.split(key, 3)
    x = jax.random.normal(kx, (batch, latent_dims), jnp.float32)
    a = jax.random.normal(ka, (batch, action_shape), jnp.float32)
    params = init_critic_params(kp, latent_dims, hidden_dims, action_shape)

    packed = pack_critic_params(params, latent_dims)   # one-time packing
    q1, q2 = critic_forward(x, a, packed)
    jax.block_until_ready((q1, q2))

    r1, r2 = _reference_forward(x, a, params)
    assert q1.shape == (batch, 1) and q2.shape == (batch, 1)
    assert jnp.allclose(q1, r1, atol=1e-4, rtol=1e-4)
    assert jnp.allclose(q2, r2, atol=1e-4, rtol=1e-4)

    print("KERNEL_OK")
</pallas_src>

<mosaic_0001>
module attributes {stable_mosaic.version = 11 : i64} {
  func.func @_critic_kernel(%arg0: memref<8x24xf32, #tpu.memory_space<vmem>>, %arg1: memref<8x8xf32, #tpu.memory_space<vmem>>, %arg2: memref<24x64xf32, #tpu.memory_space<vmem>>, %arg3: memref<8x64xf32, #tpu.memory_space<vmem>>, %arg4: memref<64x64xf32, #tpu.memory_space<vmem>>, %arg5: memref<6x64xf32, #tpu.memory_space<vmem>>, %arg6: memref<8x2xf32, #tpu.memory_space<vmem>>) attributes {dimension_semantics = [], scalar_prefetch = 0 : i64, scratch_operands = 0 : i64, tpu.core_type = #tpu.core_type<tc>} {
    %c0 = arith.constant 0 : index
    %c0_0 = arith.constant 0 : index
    %0 = vector.load %arg5[%c0, %c0_0] : memref<6x64xf32, #tpu.memory_space<vmem>>, vector<6x64xf32>
    %1 = vector.extract_strided_slice %0 {offsets = [0, 0], sizes = [1, 64], strides = [1, 1]} : vector<6x64xf32> to vector<1x64xf32>
    %2 = vector.extract_strided_slice %0 {offsets = [1, 0], sizes = [1, 64], strides = [1, 1]} : vector<6x64xf32> to vector<1x64xf32>
    %3 = vector.extract_strided_slice %0 {offsets = [2, 0], sizes = [1, 64], strides = [1, 1]} : vector<6x64xf32> to vector<1x64xf32>
    %4 = vector.extract_strided_slice %0 {offsets = [3, 0], sizes = [1, 64], strides = [1, 1]} : vector<6x64xf32> to vector<1x64xf32>
    %5 = vector.extract_strided_slice %0 {offsets = [4, 0], sizes = [1, 64], strides = [1, 1]} : vector<6x64xf32> to vector<1x64xf32>
    %6 = vector.extract_strided_slice %0 {offsets = [5, 0], sizes = [1, 2], strides = [1, 1]} : vector<6x64xf32> to vector<1x2xf32>
    %7 = tpu.iota {dimensions = array<i32: 0>} : vector<64x2xi32>
    %c32_i32 = arith.constant 32 : i32
    %8 = vector.broadcast %c32_i32 : i32 to vector<64x2xi32>
    %9 = arith.cmpi sge, %7, %8 : vector<64x2xi32>
    %10 = arith.extui %9 : vector<64x2xi1> to vector<64x2xi32>
    %11 = tpu.iota {dimensions = array<i32: 1>} : vector<64x2xi32>
    %12 = arith.cmpi eq, %10, %11 : vector<64x2xi32>
    %13 = arith.extui %12 : vector<64x2xi1> to vector<64x2xi32>
    %14 = arith.sitofp %13 : vector<64x2xi32> to vector<64x2xf32>
    %15 = tpu.iota {dimensions = array<i32: 1>} : vector<2x64xi32>
    %c32_i32_1 = arith.constant 32 : i32
    %16 = vector.broadcast %c32_i32_1 : i32 to vector<2x64xi32>
    %17 = arith.cmpi sge, %15, %16 : vector<2x64xi32>
    %18 = arith.extui %17 : vector<2x64xi1> to vector<2x64xi32>
    %19 = tpu.iota {dimensions = array<i32: 0>} : vector<2x64xi32>
    %20 = arith.cmpi eq, %18, %19 : vector<2x64xi32>
    %21 = arith.extui %20 : vector<2x64xi1> to vector<2x64xi32>
    %22 = arith.sitofp %21 : vector<2x64xi32> to vector<2x64xf32>
    %c0_2 = arith.constant 0 : index
    %c0_3 = arith.constant 0 : index
    %23 = vector.load %arg0[%c0_2, %c0_3] : memref<8x24xf32, #tpu.memory_space<vmem>>, vector<8x24xf32>
    %c0_4 = arith.constant 0 : index
    %c0_5 = arith.constant 0 : index
    %24 = vector.load %arg2[%c0_4, %c0_5] : memref<24x64xf32, #tpu.memory_space<vmem>>, vector<24x64xf32>
    %cst = arith.constant dense<0.000000e+00> : vector<8x64xf32>
    %25 = tpu.matmul %23, %24, %cst {dimension_numbers = #tpu.dot_dimension_numbers<[1], [0], [0], [1], [0, 0, 1, 1], [], []>} : vector<8x24xf32>, vector<24x64xf32>, vector<8x64xf32> -> vector<8x64xf32>
    %c0_6 = arith.constant 0 : index
    %c0_7 = arith.constant 0 : index
    %26 = vector.load %arg1[%c0_6, %c0_7] : memref<8x8xf32, #tpu.memory_space<vmem>>, vector<8x8xf32>
    %c0_8 = arith.constant 0 : index
    %c0_9 = arith.constant 0 : index
    %27 = vector.load %arg3[%c0_8, %c0_9] : memref<8x64xf32, #tpu.memory_space<vmem>>, vector<8x64xf32>
    %cst_10 = arith.constant dense<0.000000e+00> : vector<8x64xf32>
    %28 = tpu.matmul %26, %27, %cst_10 {dimension_numbers = #tpu.dot_dimension_numbers<[1], [0], [0], [1], [0, 0, 1, 1], [], []>} : vector<8x8xf32>, vector<8x64xf32>, vector<8x64xf32> -> vector<8x64xf32>
    %29 = arith.addf %25, %28 : vector<8x64xf32>
    %30 = vector.broadcast %1 : vector<1x64xf32> to vector<8x64xf32>
    %31 = arith.addf %29, %30 : vector<8x64xf32>
    %cst_11 = arith.constant dense<0.000000e+00> : vector<8x2xf32>
    %32 = tpu.matmul %31, %14, %cst_11 {dimension_numbers = #tpu.dot_dimension_numbers<[1], [0], [0], [1], [0, 0, 1, 1], [], []>} : vector<8x64xf32>, vector<64x2xf32>, vector<8x2xf32> -> vector<8x2xf32>
    %cst_12 = arith.constant 3.125000e-02 : f32
    %33 = vector.broadcast %cst_12 : f32 to vector<8x2xf32>
    %34 = arith.mulf %32, %33 : vector<8x2xf32>
    %cst_13 = arith.constant dense<0.000000e+00> : vector<8x64xf32>
    %35 = tpu.matmul %34, %22, %cst_13 {dimension_numbers = #tpu.dot_dimension_numbers<[1], [0], [0], [1], [0, 0, 1, 1], [], []>} : vector<8x2xf32>, vector<2x64xf32>, vector<8x64xf32> -> vector<8x64xf32>
    %36 = arith.subf %31, %35 : vector<8x64xf32>
    %37 = arith.mulf %36, %36 : vector<8x64xf32>
    %cst_14 = arith.constant dense<0.000000e+00> : vector<8x2xf32>
    %38 = tpu.matmul %37, %14, %cst_14 {dimension_numbers = #tpu.dot_dimension_numbers<[1], [0], [0], [1], [0, 0, 1, 1], [], []>} : vector<8x64xf32>, vector<64x2xf32>, vector<8x2xf32> -> vector<8x2xf32>
    %cst_15 = arith.constant 3.125000e-02 : f32
    %39 = vector.broadcast %cst_15 : f32 to vector<8x2xf32>
    %40 = arith.mulf %38, %39 : vector<8x2xf32>
    %cst_16 = arith.constant 9.99999974E-6 : f32
    %41 = vector.broadcast %cst_16 : f32 to vector<8x2xf32>
    %42 = arith.addf %40, %41 : vector<8x2xf32>
    %43 = math.rsqrt %42 : vector<8x2xf32>
    %cst_17 = arith.constant dense<0.000000e+00> : vector<8x64xf32>
    %44 = tpu.matmul %43, %22, %cst_17 {dimension_numbers = #tpu.dot_dimension_numbers<[1], [0], [0], [1], [0, 0, 1, 1], [], []>} : vector<8x2xf32>, vector<2x64xf32>, vector<8x64xf32> -> vector<8x64xf32>
    %45 = arith.mulf %36, %44 : vector<8x64xf32>
    %46 = vector.broadcast %2 : vector<1x64xf32> to vector<8x64xf32>
    %47 = arith.mulf %45, %46 : vector<8x64xf32>
    %48 = vector.broadcast %3 : vector<1x64xf32> to vector<8x64xf32>
    %49 = arith.addf %47, %48 : vector<8x64xf32>
    %50 = math.tanh %49 : vector<8x64xf32>
    %c0_18 = arith.constant 0 : index
    %c0_19 = arith.constant 0 : index
    %51 = vector.load %arg4[%c0_18, %c0_19] : memref<64x64xf32, #tpu.memory_space<vmem>>, vector<64x64xf32>
    %cst_20 = arith.constant dense<0.000000e+00> : vector<8x64xf32>
    %52 = tpu.matmul %50, %51, %cst_20 {dimension_numbers = #tpu.dot_dimension_numbers<[1], [0], [0], [1], [0, 0, 1, 1], [], []>} : vector<8x64xf32>, vector<64x64xf32>, vector<8x64xf32> -> vector<8x64xf32>
    %53 = vector.broadcast %4 : vector<1x64xf32> to vector<8x64xf32>
    %54 = arith.addf %52, %53 : vector<8x64xf32>
    %cst_21 = arith.constant 0.000000e+00 : f32
    %55 = vector.broadcast %cst_21 : f32 to vector<8x64xf32>
    %56 = arith.cmpf ogt, %54, %55 : vector<8x64xf32>
    %cst_22 = arith.constant 0.000000e+00 : f32
    %57 = vector.broadcast %cst_22 : f32 to vector<8x64xf32>
    %58 = arith.minimumf %54, %57 : vector<8x64xf32>
    %59 = math.exp %58 : vector<8x64xf32>
    %cst_23 = arith.constant 1.000000e+00 : f32
    %60 = vector.broadcast %cst_23 : f32 to vector<8x64xf32>
    %61 = arith.subf %59, %60 : vector<8x64xf32>
    %62 = arith.select %56, %54, %61 : vector<8x64xi1>, vector<8x64xf32>
    %63 = vector.broadcast %5 : vector<1x64xf32> to vector<8x64xf32>
    %64 = arith.mulf %62, %63 : vector<8x64xf32>
    %cst_24 = arith.constant dense<0.000000e+00> : vector<8x2xf32>
    %65 = tpu.matmul %64, %14, %cst_24 {dimension_numbers = #tpu.dot_dimension_numbers<[1], [0], [0], [1], [0, 0, 1, 1], [], []>} : vector<8x64xf32>, vector<64x2xf32>, vector<8x2xf32> -> vector<8x2xf32>
    %66 = vector.broadcast %6 : vector<1x2xf32> to vector<8x2xf32>
    %67 = arith.addf %65, %66 : vector<8x2xf32>
    %c0_25 = arith.constant 0 : index
    %c0_26 = arith.constant 0 : index
    %68 = vector.load %arg6[%c0_25, %c0_26] : memref<8x2xf32, #tpu.memory_space<vmem>>, vector<8x2xf32>
    tpu.vector_store %arg6[%c0_25, %c0_26], %67 {strides = array<i32>} : memref<8x2xf32, #tpu.memory_space<vmem>>, vector<8x2xf32>,
    return
  }
}

</mosaic_0001>

<llo_original>
// kernel: critic_forward.1
$region0: #{critic_forward.1}
  #allocation0 [shape = 'u32[]', space=smem, size = 0x4, offset = 0x4, fixed_abs, tag = 'smem constant byte address 0x4 - core index']
  #allocation1 [shape = 'u32[144,128]{1,0:T(1,128)}', space=vmem, size = 0x12000, scoped, tag = 'internal scratch']
  %s0 = inlined_call_operand.hbm [shape: f32[8,24], index: 0, kind: input, shape index: {}]
  %s1 = inlined_call_operand.hbm [shape: f32[8,8], index: 1, kind: input, shape index: {}]
  %s2 = inlined_call_operand.hbm [shape: f32[24,64], index: 2, kind: input, shape index: {}]
  %s3 = inlined_call_operand.vmem [shape: f32[8,64], index: 3, kind: input, shape index: {}]
  %s4 = inlined_call_operand.hbm [shape: f32[64,64], index: 4, kind: input, shape index: {}]
  %s5 = inlined_call_operand.hbm [shape: f32[6,64], index: 5, kind: input, shape index: {}]
  %s6 = inlined_call_operand.vmem [shape: f32[8,2], index: 6, kind: output, shape index: {}]
  %s7 = sld [smem:[#allocation0]]
  $region54: #{critic_forward.1} parent=0
    _
  %s9 = ssub.s32 1, %s7
  %s10 = scalar_select 0, %s9, %s7
  $region1: #{critic_forward.1} parent=0
    #allocation2 [shape = 'u8[4096]{0}', space=vmem, size = 0x1000, scoped, tag = 'input window, operand 0, single buffered']
    #allocation3 [shape = 's32[1]{0}', space=sflag, size = 0x4, scoped, tag = 'scoped memory for critic_forward.1']
    #allocation4 [shape = 'u8[4096]{0}', space=vmem, size = 0x1000, scoped, tag = 'input window, operand 1, single buffered']
    #allocation5 [shape = 's32[1]{0}', space=sflag, size = 0x4, scoped, tag = 'scoped memory for critic_forward.1']
    #allocation6 [shape = 'u8[12288]{0}', space=vmem, size = 0x3000, scoped, tag = 'input window, operand 2, single buffered']
    #allocation7 [shape = 'u8[32768]{0}', space=vmem, size = 0x8000, scoped, tag = 'input window, operand 4, single buffered']
    #allocation8 [shape = 's32[1]{0}', space=sflag, size = 0x4, scoped, tag = 'scoped memory for critic_forward.1']
    #allocation9 [shape = 'u8[4096]{0}', space=vmem, size = 0x1000, scoped, tag = 'input window, operand 5, single buffered']
    %11 = vsyncpa [#allocation3], 0
    %12 = vsyncpa [#allocation5], 0
    %13 = vsyncpa [#allocation8], 0
    // Predicated region
    $region2: #{critic_forward.1} parent=1 // pred_check
      _
    $region3: #{critic_forward.1} parent=1 // pred_check_branch
      %15 = sbr.rel (0) target = $region5
    $region4: #{critic_forward.1} parent=1 // pred_region
      %s17 = ssub.s32 128, 128
      %18 = vsyncadd [#allocation3], %s17
      %s20 = sshll.u32 [#allocation2], 4
      %s21 = int_to_ptr.vmem [resolvable:$true] %s20
      %23 = dma.hbm_to_vmem [thread:$0]  %s0, 128, %s21, [#allocation3]
    $region5: #{critic_forward.1} parent=1 // pred_fallthru
      _
    // Predicated region
    $region6: #{critic_forward.1} parent=1 // pred_check
      _
    $region7: #{critic_forward.1} parent=1 // pred_check_branch
      %25 = sbr.rel (0) target = $region9
    $region8: #{critic_forward.1} parent=1 // pred_region
      %s27 = ssub.s32 128, 128
      %28 = vsyncadd [#allocation5], %s27
      %s30 = sshll.u32 [#allocation4], 4
      %s31 = int_to_ptr.vmem [resolvable:$true] %s30
      %33 = dma.hbm_to_vmem [thread:$0]  %s1, 128, %s31, [#allocation5]
    $region9: #{critic_forward.1} parent=1 // pred_fallthru
      _
    // Predicated region
    $region10: #{critic_forward.1} parent=1 // pred_check
      _
    $region11: #{critic_forward.1} parent=1 // pred_check_branch
      %35 = sbr.rel (0) target = $region13
    $region12: #{critic_forward.1} parent=1 // pred_region
      %s37 = ssub.s32 384, 384
      %38 = vsyncadd [#allocation5], %s37
      %s39 = sshll.u32 [#allocation6], 4
      %s40 = int_to_ptr.vmem [resolvable:$true] %s39
      %45 = dma.hbm_to_vmem [thread:$0]  %s2, 384, %s40, [#allocation5], 128, 128, 8
    $region13: #{critic_forward.1} parent=1 // pred_fallthru
      _
    // Predicated region
    $region14: #{critic_forward.1} parent=1 // pred_check
      _
    $region15: #{critic_forward.1} parent=1 // pred_check_branch
      %47 = sbr.rel (0) target = $region17
    $region16: #{critic_forward.1} parent=1 // pred_region
      _
    $region17: #{critic_forward.1} parent=1 // pred_fallthru
      _
    // Predicated region
    $region18: #{critic_forward.1} parent=1 // pred_check
      _
    $region19: #{critic_forward.1} parent=1 // pred_check_branch
      %49 = sbr.rel (0) target = $region21
    $region20: #{critic_forward.1} parent=1 // pred_region
      %s51 = ssub.s32 1024, 1024
      %52 = vsyncadd [#allocation8], %s51
      %s53 = sshll.u32 [#allocation7], 4
      %s54 = int_to_ptr.vmem [resolvable:$true] %s53
      %59 = dma.hbm_to_vmem [thread:$0]  %s4, 1024, %s54, [#allocation8], 128, 128, 8
    $region21: #{critic_forward.1} parent=1 // pred_fallthru
      _
    // Predicated region
    $region22: #{critic_forward.1} parent=1 // pred_check
      _
    $region23: #{critic_forward.1} parent=1 // pred_check_branch
      %61 = sbr.rel (0) target = $region25
    $region24: #{critic_forward.1} parent=1 // pred_region
      %s63 = ssub.s32 128, 128
      %64 = vsyncadd [#allocation8], %s63
      %s66 = sshll.u32 [#allocation9], 4
      %s67 = int_to_ptr.vmem [resolvable:$true] %s66
      %69 = dma.hbm_to_vmem [thread:$0]  %s5, 128, %s67, [#allocation8]
    $region25: #{critic_forward.1} parent=1 // pred_fallthru
      _
    // Predicated region
    $region26: #{critic_forward.1} parent=1 // pred_check
      _
    $region27: #{critic_forward.1} parent=1 // pred_check_branch
      %71 = sbr.rel (0) target = $region29
    $region28: #{critic_forward.1} parent=1 // pred_region
      %72 = dma.done [#allocation3], 128
    $region29: #{critic_forward.1} parent=1 // pred_fallthru
      _
    // Predicated region
    $region30: #{critic_forward.1} parent=1 // pred_check
      _
    $region31: #{critic_forward.1} parent=1 // pred_check_branch
      %74 = sbr.rel (0) target = $region33
    $region32: #{critic_forward.1} parent=1 // pred_region
      %75 = dma.done [#allocation5], 128
    $region33: #{critic_forward.1} parent=1 // pred_fallthru
      _
    // Predicated region
    $region34: #{critic_forward.1} parent=1 // pred_check
      _
    $region35: #{critic_forward.1} parent=1 // pred_check_branch
      %77 = sbr.rel (0) target = $region37
    $region36: #{critic_forward.1} parent=1 // pred_region
      %78 = dma.done [#allocation5], 384
    $region37: #{critic_forward.1} parent=1 // pred_fallthru
      _
    // Predicated region
    $region38: #{critic_forward.1} parent=1 // pred_check
      _
    $region39: #{critic_forward.1} parent=1 // pred_check_branch
      %80 = sbr.rel (0) target = $region41
    $region40: #{critic_forward.1} parent=1 // pred_region
      %81 = dma.done [#allocation8], 1024
    $region41: #{critic_forward.1} parent=1 // pred_fallthru
      _
    // Predicated region
    $region42: #{critic_forward.1} parent=1 // pred_check
      _
    $region43: #{critic_forward.1} parent=1 // pred_check_branch
      %83 = sbr.rel (0) target = $region45
    $region44: #{critic_forward.1} parent=1 // pred_region
      %84 = dma.done [#allocation8], 128
    $region45: #{critic_forward.1} parent=1 // pred_fallthru
      _
    %v85 = vld [vmem:[#allocation9] sm:$0x3f]
    %v86 = vlaneseq
    %v87 = vshrl.u32 %v86, 7
    %v88 = vadd.s32 %v87, 8
    %v89 = vadd.s32 %v87, 16
    %v90 = vadd.s32 %v87, 24
    %v91 = vadd.s32 %v87, 32
    %v92 = vadd.s32 %v87, 40
    %v93 = vadd.s32 %v87, 48
    %v94 = vadd.s32 %v87, 56
    %vm95 = vcmp.ge.s32.totalorder %v87, 32
    %vm96 = vcmp.ge.s32.totalorder %v88, 32
    %vm97 = vcmp.ge.s32.totalorder %v89, 32
    %vm98 = vcmp.ge.s32.totalorder %v90, 32
    %vm99 = vcmp.ge.s32.totalorder %v91, 32
    %vm100 = vcmp.ge.s32.totalorder %v92, 32
    %vm101 = vcmp.ge.s32.totalorder %v93, 32
    %vm102 = vcmp.ge.s32.totalorder %v94, 32
    %v103 = vsel %vm95, 1, 0
    %v104 = vsel %vm96, 1, 0
    %v105 = vsel %vm97, 1, 0
    %v106 = vsel %vm98, 1, 0
    %v107 = vsel %vm99, 1, 0
    %v108 = vsel %vm100, 1, 0
    %v109 = vsel %vm101, 1, 0
    %v110 = vsel %vm102, 1, 0
    %v111 = vlaneseq
    %v112 = vand.u32 %v111, 127
    %vm113 = vcmp.eq.s32.totalorder %v103, %v112
    %vm114 = vcmp.eq.s32.totalorder %v104, %v112
    %vm115 = vcmp.eq.s32.totalorder %v105, %v112
    %vm116 = vcmp.eq.s32.totalorder %v106, %v112
    %vm117 = vcmp.eq.s32.totalorder %v107, %v112
    %vm118 = vcmp.eq.s32.totalorder %v108, %v112
    %vm119 = vcmp.eq.s32.totalorder %v109, %v112
    %vm120 = vcmp.eq.s32.totalorder %v110, %v112
    %v121 = vsel %vm113, 1, 0
    %v122 = vsel %vm114, 1, 0
    %v123 = vsel %vm115, 1, 0
    %v124 = vsel %vm116, 1, 0
    %v125 = vsel %vm117, 1, 0
    %v126 = vsel %vm118, 1, 0
    %v127 = vsel %vm119, 1, 0
    %v128 = vsel %vm120, 1, 0
    %v129 = vcvt.s32.f32 %v121
    %v130 = vcvt.s32.f32 %v122
    %v131 = vcvt.s32.f32 %v123
    %v132 = vcvt.s32.f32 %v124
    %v133 = vcvt.s32.f32 %v125
    %v134 = vcvt.s32.f32 %v126
    %v135 = vcvt.s32.f32 %v127
    %v136 = vcvt.s32.f32 %v128
    %vm137 = vcmp.ge.s32.totalorder %v112, 32
    %v138 = vsel %vm137, 1, 0
    %vm139 = vcmp.eq.s32.totalorder %v138, %v87
    %v140 = vsel %vm139, 1, 0
    %v141 = vcvt.s32.f32 %v140
    %v142 = vld [vmem:[#allocation2] sm:$0xff]
    %v143 = vld [vmem:[#allocation6] sm:$0xff]
    %v144 = vld [vmem:[#allocation6 + $0x8] sm:$0xff]
    %v145 = vld [vmem:[#allocation6 + $0x10] sm:$0xff]
    %v146 = vld [vmem:[#allocation4] sm:$0xff]
    %v147 = vld [vmem:[%s3] sm:$0xff]
    %vm148 = vcmask 64512
    %v150 = vsel %vm148, %v146, 0
    %152 = vmatprep.subr.mxu0 0.0
    %153 = vmatpush1.msra.mxu0 %v147
    %154 = vmatprep.subr.mxu0 0.0
    %155 = vmatpush1.msra.mxu0 0.0
    %156 = vmatprep.subr.mxu0 0.0
    %157 = vmatpush1.msra.mxu0 0.0
    %158 = vmatprep.subr.mxu0 0.0
    %159 = vmatpush1.msra.mxu0 0.0
    %160 = vmatprep.subr.mxu0 0.0
    %161 = vmatpush1.msra.mxu0 0.0
    %162 = vmatprep.subr.mxu0 0.0
    %163 = vmatpush1.msra.mxu0 0.0
    %164 = vmatprep.subr.mxu0 0.0
    %165 = vmatpush1.msra.mxu0 0.0
    %166 = vmatprep.subr.mxu0 0.0
    %167 = vmatpush1.msra.mxu0 0.0
    %168 = vmatprep.subr.mxu0 0.0
    %169 = vmatpush1.msra.mxu0 0.0
    %170 = vmatprep.subr.mxu0 0.0
    %171 = vmatpush1.msra.mxu0 0.0
    %172 = vmatprep.subr.mxu0 0.0
    %173 = vmatpush1.msra.mxu0 0.0
    %174 = vmatprep.subr.mxu0 0.0
    %175 = vmatpush1.msra.mxu0 0.0
    %176 = vmatprep.subr.mxu0 0.0
    %177 = vmatpush1.msra.mxu0 0.0
    %178 = vmatprep.subr.mxu0 0.0
    %179 = vmatpush1.msra.mxu0 0.0
    %180 = vmatprep.subr.mxu0 0.0
    %181 = vmatpush1.msra.mxu0 0.0
    %182 = vmatprep.subr.mxu0 0.0
    %183 = vmatpush1.msra.mxu0 0.0
    %184 = vmatprep.subr.mxu0 0.0
    %185 = vmatpush1.msra.mxu0 0.0
    %186 = vmatprep.subr.mxu0 0.0
    %187 = vmatpush1.msra.mxu0 0.0
    %188 = vmatprep.subr.mxu0 0.0
    %189 = vmatpush1.msra.mxu0 0.0
    %190 = vmatprep.subr.mxu0 0.0
    %191 = vmatpush1.msra.mxu0 0.0
    %192 = vmatprep.subr.mxu0 0.0
    %193 = vmatpush1.msra.mxu0 0.0
    %194 = vmatprep.subr.mxu0 0.0
    %195 = vmatpush1.msra.mxu0 0.0
    %196 = vmatprep.subr.mxu0 0.0
    %197 = vmatpush1.msra.mxu0 0.0
    %198 = vmatprep.subr.mxu0 0.0
    %199 = vmatpush1.msra.mxu0 0.0
    %200 = vmatprep.subr.mxu0 0.0
    %201 = vmatpush1.msra.mxu0 0.0
    %202 = vmatprep.subr.mxu0 0.0
    %203 = vmatpush1.msra.mxu0 0.0
    %204 = vmatprep.subr.mxu0 0.0
    %205 = vmatpush1.msra.mxu0 0.0
    %206 = vmatprep.subr.mxu0 0.0
    %207 = vmatpush1.msra.mxu0 0.0
    %208 = vmatprep.subr.mxu0 0.0
    %209 = vmatpush1.msra.mxu0 0.0
    %210 = vmatprep.subr.mxu0 0.0
    %211 = vmatpush1.msra.mxu0 0.0
    %212 = vmatprep.subr.mxu0 0.0
    %213 = vmatpush1.msra.mxu0 0.0
    %214 = vmatprep.subr.mxu0 0.0
    %215 = vmatpush1.msra.mxu0 0.0
    %216 = vmatprep.mubr.f32.mxu0 0.0
    %217 = vmatmul.mubr.f32.gmra.mrb[0].mxu0 %v150
    %v218 = vpop.f32.mrb[0].mxu0
    %v219 = vadd.f32 0.0, %v218
    %v220 = vpop.f32.mrb[0].mxu0
    %221 = vdwg.mxu0
    %vm222 = vcmask 195584
    %v224 = vsel %vm222, %v142, 0
    %226 = vmatprep.subr.mxu0 0.0
    %227 = vmatpush1.msra.mxu0 %v143
    %228 = vmatprep.subr.mxu0 0.0
    %229 = vmatpush1.msra.mxu0 %v144
    %230 = vmatprep.subr.mxu0 0.0
    %231 = vmatpush1.msra.mxu0 %v145
    %232 = vmatprep.subr.mxu0 0.0
    %233 = vmatpush1.msra.mxu0 0.0
    %234 = vmatprep.subr.mxu0 0.0
    %235 = vmatpush1.msra.mxu0 0.0
    %236 = vmatprep.subr.mxu0 0.0
    %237 = vmatpush1.msra.mxu0 0.0
    %238 = vmatprep.subr.mxu0 0.0
    %239 = vmatpush1.msra.mxu0 0.0
    %240 = vmatprep.subr.mxu0 0.0
    %241 = vmatpush1.msra.mxu0 0.0
    %242 = vmatprep.subr.mxu0 0.0
    %243 = vmatpush1.msra.mxu0 0.0
    %244 = vmatprep.subr.mxu0 0.0
    %245 = vmatpush1.msra.mxu0 0.0
    %246 = vmatprep.subr.mxu0 0.0
    %247 = vmatpush1.msra.mxu0 0.0
    %248 = vmatprep.subr.mxu0 0.0
    %249 = vmatpush1.msra.mxu0 0.0
    %250 = vmatprep.subr.mxu0 0.0
    %251 = vmatpush1.msra.mxu0 0.0
    %252 = vmatprep.subr.mxu0 0.0
    %253 = vmatpush1.msra.mxu0 0.0
    %254 = vmatprep.subr.mxu0 0.0
    %255 = vmatpush1.msra.mxu0 0.0
    %256 = vmatprep.subr.mxu0 0.0
    %257 = vmatpush1.msra.mxu0 0.0
    %258 = vmatprep.subr.mxu0 0.0
    %259 = vmatpush1.msra.mxu0 0.0
    %260 = vmatprep.subr.mxu0 0.0
    %261 = vmatpush1.msra.mxu0 0.0
    %262 = vmatprep.subr.mxu0 0.0
    %263 = vmatpush1.msra.mxu0 0.0
    %264 = vmatprep.subr.mxu0 0.0
    %265 = vmatpush1.msra.mxu0 0.0
    %266 = vmatprep.subr.mxu0 0.0
    %267 = vmatpush1.msra.mxu0 0.0
    %268 = vmatprep.subr.mxu0 0.0
    %269 = vmatpush1.msra.mxu0 0.0
    %270 = vmatprep.subr.mxu0 0.0
    %271 = vmatpush1.msra.mxu0 0.0
    %272 = vmatprep.subr.mxu0 0.0
    %273 = vmatpush1.msra.mxu0 0.0
    %274 = vmatprep.subr.mxu0 0.0
    %275 = vmatpush1.msra.mxu0 0.0
    %276 = vmatprep.subr.mxu0 0.0
    %277 = vmatpush1.msra.mxu0 0.0
    %278 = vmatprep.subr.mxu0 0.0
    %279 = vmatpush1.msra.mxu0 0.0
    %280 = vmatprep.subr.mxu0 0.0
    %281 = vmatpush1.msra.mxu0 0.0
    %282 = vmatprep.subr.mxu0 0.0
    %283 = vmatpush1.msra.mxu0 0.0
    %284 = vmatprep.subr.mxu0 0.0
    %285 = vmatpush1.msra.mxu0 0.0
    %286 = vmatprep.subr.mxu0 0.0
    %287 = vmatpush1.msra.mxu0 0.0
    %288 = vmatprep.subr.mxu0 0.0
    %289 = vmatpush1.msra.mxu0 0.0
    %290 = vmatprep.mubr.f32.mxu0 0.0
    %291 = vmatmul.mubr.f32.gmra.mrb[0].mxu0 %v224
    %v292 = vpop.f32.mrb[0].mxu0
    %v293 = vadd.f32 %v219, %v292
    %v294 = vpop.f32.mrb[0].mxu0
    %295 = vdwg.mxu0
    %v296 = vlaneseq
    %v297 = vshrl.u32 %v296, 7
    %v298 = vsub.s32 0, %v297
    %v299 = vrot.slane %v85, %v298
    %v300 = vadd.f32 %v293, %v299
    %vm301 = vcmask 523264
    %v303 = vsel %vm301, %v300, 0
    %305 = vmatprep.subr.mxu0 0.0
    %306 = vmatpush1.msra.mxu0 %v129
    %307 = vmatprep.subr.mxu0 0.0
    %308 = vmatpush1.msra.mxu0 %v130
    %309 = vmatprep.subr.mxu0 0.0
    %310 = vmatpush1.msra.mxu0 %v131
    %311 = vmatprep.subr.mxu0 0.0
    %312 = vmatpush1.msra.mxu0 %v132
    %313 = vmatprep.subr.mxu0 0.0
    %314 = vmatpush1.msra.mxu0 %v133
    %315 = vmatprep.subr.mxu0 0.0
    %316 = vmatpush1.msra.mxu0 %v134
    %317 = vmatprep.subr.mxu0 0.0
    %318 = vmatpush1.msra.mxu0 %v135
    %319 = vmatprep.subr.mxu0 0.0
    %320 = vmatpush1.msra.mxu0 %v136
    %321 = vmatprep.subr.mxu0 0.0
    %322 = vmatpush1.msra.mxu0 0.0
    %323 = vmatprep.subr.mxu0 0.0
    %324 = vmatpush1.msra.mxu0 0.0
    %325 = vmatprep.subr.mxu0 0.0
    %326 = vmatpush1.msra.mxu0 0.0
    %327 = vmatprep.subr.mxu0 0.0
    %328 = vmatpush1.msra.mxu0 0.0
    %329 = vmatprep.subr.mxu0 0.0
    %330 = vmatpush1.msra.mxu0 0.0
    %331 = vmatprep.subr.mxu0 0.0
    %332 = vmatpush1.msra.mxu0 0.0
    %333 = vmatprep.subr.mxu0 0.0
    %334 = vmatpush1.msra.mxu0 0.0
    %335 = vmatprep.subr.mxu0 0.0
    %336 = vmatpush1.msra.mxu0 0.0
    %337 = vmatprep.subr.mxu0 0.0
    %338 = vmatpush1.msra.mxu0 0.0
    %339 = vmatprep.subr.mxu0 0.0
    %340 = vmatpush1.msra.mxu0 0.0
    %341 = vmatprep.subr.mxu0 0.0
    %342 = vmatpush1.msra.mxu0 0.0
    %343 = vmatprep.subr.mxu0 0.0
    %344 = vmatpush1.msra.mxu0 0.0
    %345 = vmatprep.subr.mxu0 0.0
    %346 = vmatpush1.msra.mxu0 0.0
    %347 = vmatprep.subr.mxu0 0.0
    %348 = vmatpush1.msra.mxu0 0.0
    %349 = vmatprep.subr.mxu0 0.0
    %350 = vmatpush1.msra.mxu0 0.0
    %351 = vmatprep.subr.mxu0 0.0
    %352 = vmatpush1.msra.mxu0 0.0
    %353 = vmatprep.subr.mxu0 0.0
    %354 = vmatpush1.msra.mxu0 0.0
    %355 = vmatprep.subr.mxu0 0.0
    %356 = vmatpush1.msra.mxu0 0.0
    %357 = vmatprep.subr.mxu0 0.0
    %358 = vmatpush1.msra.mxu0 0.0
    %359 = vmatprep.subr.mxu0 0.0
    %360 = vmatpush1.msra.mxu0 0.0
    %361 = vmatprep.subr.mxu0 0.0
    %362 = vmatpush1.msra.mxu0 0.0
    %363 = vmatprep.subr.mxu0 0.0
    %364 = vmatpush1.msra.mxu0 0.0
    %365 = vmatprep.subr.mxu0 0.0
    %366 = vmatpush1.msra.mxu0 0.0
    %367 = vmatprep.subr.mxu0 0.0
    %368 = vmatpush1.msra.mxu0 0.0
    %369 = vmatprep.mubr.f32.mxu0 0.0
    %370 = vmatmul.mubr.f32.gmra.mrb[0].mxu0 %v303
    %v371 = vpop.f32.mrb[0].mxu0
    %v372 = vadd.f32 0.0, %v371
    %v373 = vpop.f32.mrb[0].mxu0
    %374 = vdwg.mxu0
    %v375 = vmul.f32 %v372, 0.03125
    %vm376 = vcmask 15360
    %v378 = vsel %vm376, %v375, 0
    %vm380 = vcmask 1041408
    %v382 = vsel %vm380, %v141, 0
    %384 = vmatprep.subr.mxu0 0.0
    %385 = vmatpush1.msra.mxu0 %v382
    %386 = vmatprep.subr.mxu0 0.0
    %387 = vmatpush1.msra.mxu0 0.0
    %388 = vmatprep.subr.mxu0 0.0
    %389 = vmatpush1.msra.mxu0 0.0
    %390 = vmatprep.subr.mxu0 0.0
    %391 = vmatpush1.msra.mxu0 0.0
    %392 = vmatprep.subr.mxu0 0.0
    %393 = vmatpush1.msra.mxu0 0.0
    %394 = vmatprep.subr.mxu0 0.0
    %395 = vmatpush1.msra.mxu0 0.0
    %396 = vmatprep.subr.mxu0 0.0
    %397 = vmatpush1.msra.mxu0 0.0
    %398 = vmatprep.subr.mxu0 0.0
    %399 = vmatpush1.msra.mxu0 0.0
    %400 = vmatprep.subr.mxu0 0.0
    %401 = vmatpush1.msra.mxu0 0.0
    %402 = vmatprep.subr.mxu0 0.0
    %403 = vmatpush1.msra.mxu0 0.0
    %404 = vmatprep.subr.mxu0 0.0
    %405 = vmatpush1.msra.mxu0 0.0
    %406 = vmatprep.subr.mxu0 0.0
    %407 = vmatpush1.msra.mxu0 0.0
    %408 = vmatprep.subr.mxu0 0.0
    %409 = vmatpush1.msra.mxu0 0.0
    %410 = vmatprep.subr.mxu0 0.0
    %411 = vmatpush1.msra.mxu0 0.0
    %412 = vmatprep.subr.mxu0 0.0
    %413 = vmatpush1.msra.mxu0 0.0
    %414 = vmatprep.subr.mxu0 0.0
    %415 = vmatpush1.msra.mxu0 0.0
    %416 = vmatprep.subr.mxu0 0.0
    %417 = vmatpush1.msra.mxu0 0.0
    %418 = vmatprep.subr.mxu0 0.0
    %419 = vmatpush1.msra.mxu0 0.0
    %420 = vmatprep.subr.mxu0 0.0
    %421 = vmatpush1.msra.mxu0 0.0
    %422 = vmatprep.subr.mxu0 0.0
    %423 = vmatpush1.msra.mxu0 0.0
    %424 = vmatprep.subr.mxu0 0.0
    %425 = vmatpush1.msra.mxu0 0.0
    %426 = vmatprep.subr.mxu0 0.0
    %427 = vmatpush1.msra.mxu0 0.0
    %428 = vmatprep.subr.mxu0 0.0
    %429 = vmatpush1.msra.mxu0 0.0
    %430 = vmatprep.subr.mxu0 0.0
    %431 = vmatpush1.msra.mxu0 0.0
    %432 = vmatprep.subr.mxu0 0.0
    %433 = vmatpush1.msra.mxu0 0.0
    %434 = vmatprep.subr.mxu0 0.0
    %435 = vmatpush1.msra.mxu0 0.0
    %436 = vmatprep.subr.mxu0 0.0
    %437 = vmatpush1.msra.mxu0 0.0
    %438 = vmatprep.subr.mxu0 0.0
    %439 = vmatpush1.msra.mxu0 0.0
    %440 = vmatprep.subr.mxu0 0.0
    %441 = vmatpush1.msra.mxu0 0.0
    %442 = vmatprep.subr.mxu0 0.0
    %443 = vmatpush1.msra.mxu0 0.0
    %444 = vmatprep.subr.mxu0 0.0
    %445 = vmatpush1.msra.mxu0 0.0
    %446 = vmatprep.subr.mxu0 0.0
    %447 = vmatpush1.msra.mxu0 0.0
    %448 = vmatprep.mubr.f32.mxu0 0.0
    %449 = vmatmul.mubr.f32.gmra.mrb[0].mxu0 %v378
    %v450 = vpop.f32.mrb[0].mxu0
    %v451 = vadd.f32 0.0, %v450
    %v452 = vpop.f32.mrb[0].mxu0
    %453 = vdwg.mxu0
    %v454 = vsub.f32 %v300, %v451
    %v455 = vmul.f32 %v454, %v454
    %v457 = vsel %vm301, %v455, 0
    %459 = vmatprep.subr.mxu0 0.0
    %460 = vmatpush1.msra.mxu0 %v129
    %461 = vmatprep.subr.mxu0 0.0
    %462 = vmatpush1.msra.mxu0 %v130
    %463 = vmatprep.subr.mxu0 0.0
    %464 = vmatpush1.msra.mxu0 %v131
    %465 = vmatprep.subr.mxu0 0.0
    %466 = vmatpush1.msra.mxu0 %v132
    %467 = vmatprep.subr.mxu0 0.0
    %468 = vmatpush1.msra.mxu0 %v133
    %469 = vmatprep.subr.mxu0 0.0
    %470 = vmatpush1.msra.mxu0 %v134
    %471 = vmatprep.subr.mxu0 0.0
    %472 = vmatpush1.msra.mxu0 %v135
    %473 = vmatprep.subr.mxu0 0.0
    %474 = vmatpush1.msra.mxu0 %v136
    %475 = vmatprep.subr.mxu0 0.0
    %476 = vmatpush1.msra.mxu0 0.0
    %477 = vmatprep.subr.mxu0 0.0
    %478 = vmatpush1.msra.mxu0 0.0
    %479 = vmatprep.subr.mxu0 0.0
    %480 = vmatpush1.msra.mxu0 0.0
    %481 = vmatprep.subr.mxu0 0.0
    %482 = vmatpush1.msra.mxu0 0.0
    %483 = vmatprep.subr.mxu0 0.0
    %484 = vmatpush1.msra.mxu0 0.0
    %485 = vmatprep.subr.mxu0 0.0
    %486 = vmatpush1.msra.mxu0 0.0
    %487 = vmatprep.subr.mxu0 0.0
    %488 = vmatpush1.msra.mxu0 0.0
    %489 = vmatprep.subr.mxu0 0.0
    %490 = vmatpush1.msra.mxu0 0.0
    %491 = vmatprep.subr.mxu0 0.0
    %492 = vmatpush1.msra.mxu0 0.0
    %493 = vmatprep.subr.mxu0 0.0
    %494 = vmatpush1.msra.mxu0 0.0
    %495 = vmatprep.subr.mxu0 0.0
    %496 = vmatpush1.msra.mxu0 0.0
    %497 = vmatprep.subr.mxu0 0.0
    %498 = vmatpush1.msra.mxu0 0.0
    %499 = vmatprep.subr.mxu0 0.0
    %500 = vmatpush1.msra.mxu0 0.0
    %501 = vmatprep.subr.mxu0 0.0
    %502 = vmatpush1.msra.mxu0 0.0
    %503 = vmatprep.subr.mxu0 0.0
    %504 = vmatpush1.msra.mxu0 0.0
    %505 = vmatprep.subr.mxu0 0.0
    %506 = vmatpush1.msra.mxu0 0.0
    %507 = vmatprep.subr.mxu0 0.0
    %508 = vmatpush1.msra.mxu0 0.0
    %509 = vmatprep.subr.mxu0 0.0
    %510 = vmatpush1.msra.mxu0 0.0
    %511 = vmatprep.subr.mxu0 0.0
    %512 = vmatpush1.msra.mxu0 0.0
    %513 = vmatprep.subr.mxu0 0.0
    %514 = vmatpush1.msra.mxu0 0.0
    %515 = vmatprep.subr.mxu0 0.0
    %516 = vmatpush1.msra.mxu0 0.0
    %517 = vmatprep.subr.mxu0 0.0
    %518 = vmatpush1.msra.mxu0 0.0
    %519 = vmatprep.subr.mxu0 0.0
    %520 = vmatpush1.msra.mxu0 0.0
    %521 = vmatprep.subr.mxu0 0.0
    %522 = vmatpush1.msra.mxu0 0.0
    %523 = vmatprep.mubr.f32.mxu0 0.0
    %524 = vmatmul.mubr.f32.gmra.mrb[0].mxu0 %v457
    %v525 = vpop.f32.mrb[0].mxu0
    %v526 = vadd.f32 0.0, %v525
    %v527 = vpop.f32.mrb[0].mxu0
    %528 = vdwg.mxu0
    %v529 = vmul.f32 %v526, 0.03125
    %v530 = vadd.f32 %v529, 1e-05
    %v531 = vrsqrt.pop %v530
    %v533 = vsel %vm376, %v531, 0
    %535 = vmatprep.subr.mxu0 0.0
    %536 = vmatpush1.msra.mxu0 %v382
    %537 = vmatprep.subr.mxu0 0.0
    %538 = vmatpush1.msra.mxu0 0.0
    %539 = vmatprep.subr.mxu0 0.0
    %540 = vmatpush1.msra.mxu0 0.0
    %541 = vmatprep.subr.mxu0 0.0
    %542 = vmatpush1.msra.mxu0 0.0
    %543 = vmatprep.subr.mxu0 0.0
    %544 = vmatpush1.msra.mxu0 0.0
    %545 = vmatprep.subr.mxu0 0.0
    %546 = vmatpush1.msra.mxu0 0.0
    %547 = vmatprep.subr.mxu0 0.0
    %548 = vmatpush1.msra.mxu0 0.0
    %549 = vmatprep.subr.mxu0 0.0
    %550 = vmatpush1.msra.mxu0 0.0
    %551 = vmatprep.subr.mxu0 0.0
    %552 = vmatpush1.msra.mxu0 0.0
    %553 = vmatprep.subr.mxu0 0.0
    %554 = vmatpush1.msra.mxu0 0.0
    %555 = vmatprep.subr.mxu0 0.0
    %556 = vmatpush1.msra.mxu0 0.0
    %557 = vmatprep.subr.mxu0 0.0
    %558 = vmatpush1.msra.mxu0 0.0
    %559 = vmatprep.subr.mxu0 0.0
    %560 = vmatpush1.msra.mxu0 0.0
    %561 = vmatprep.subr.mxu0 0.0
    %562 = vmatpush1.msra.mxu0 0.0
    %563 = vmatprep.subr.mxu0 0.0
    %564 = vmatpush1.msra.mxu0 0.0
    %565 = vmatprep.subr.mxu0 0.0
    %566 = vmatpush1.msra.mxu0 0.0
    %567 = vmatprep.subr.mxu0 0.0
    %568 = vmatpush1.msra.mxu0 0.0
    %569 = vmatprep.subr.mxu0 0.0
    %570 = vmatpush1.msra.mxu0 0.0
    %571 = vmatprep.subr.mxu0 0.0
    %572 = vmatpush1.msra.mxu0 0.0
    %573 = vmatprep.subr.mxu0 0.0
    %574 = vmatpush1.msra.mxu0 0.0
    %575 = vmatprep.subr.mxu0 0.0
    %576 = vmatpush1.msra.mxu0 0.0
    %577 = vmatprep.subr.mxu0 0.0
    %578 = vmatpush1.msra.mxu0 0.0
    %579 = vmatprep.subr.mxu0 0.0
    %580 = vmatpush1.msra.mxu0 0.0
    %581 = vmatprep.subr.mxu0 0.0
    %582 = vmatpush1.msra.mxu0 0.0
    %583 = vmatprep.subr.mxu0 0.0
    %584 = vmatpush1.msra.mxu0 0.0
    %585 = vmatprep.subr.mxu0 0.0
    %586 = vmatpush1.msra.mxu0 0.0
    %587 = vmatprep.subr.mxu0 0.0
    %588 = vmatpush1.msra.mxu0 0.0
    %589 = vmatprep.subr.mxu0 0.0
    %590 = vmatpush1.msra.mxu0 0.0
    %591 = vmatprep.subr.mxu0 0.0
    %592 = vmatpush1.msra.mxu0 0.0
    %593 = vmatprep.subr.mxu0 0.0
    %594 = vmatpush1.msra.mxu0 0.0
    %595 = vmatprep.subr.mxu0 0.0
    %596 = vmatpush1.msra.mxu0 0.0
    %597 = vmatprep.subr.mxu0 0.0
    %598 = vmatpush1.msra.mxu0 0.0
    %599 = vmatprep.mubr.f32.mxu0 0.0
    %600 = vmatmul.mubr.f32.gmra.mrb[0].mxu0 %v533
    %v601 = vpop.f32.mrb[0].mxu0
    %v602 = vadd.f32 0.0, %v601
    %v603 = vpop.f32.mrb[0].mxu0
    %604 = vdwg.mxu0
    %v605 = vmul.f32 %v454, %v602
    %v606 = vlaneseq
    %v607 = vshrl.u32 %v606, 7
    %v608 = vsub.s32 1, %v607
    %v609 = vrot.slane %v85, %v608
    %v610 = vmul.f32 %v605, %v609
    %v611 = vlaneseq
    %v612 = vshrl.u32 %v611, 7
    %v613 = vsub.s32 2, %v612
    %v614 = vrot.slane %v85, %v613
    %v615 = vadd.f32 %v610, %v614
    %v616 = vtanh.pop %v615
    %v617 = vld [vmem:[#allocation7] sm:$0xff]
    %v618 = vld [vmem:[#allocation7 + $0x8] sm:$0xff]
    %v619 = vld [vmem:[#allocation7 + $0x10] sm:$0xff]
    %v620 = vld [vmem:[#allocation7 + $0x18] sm:$0xff]
    %v621 = vld [vmem:[#allocation7 + $0x20] sm:$0xff]
    %v622 = vld [vmem:[#allocation7 + $0x28] sm:$0xff]
    %v623 = vld [vmem:[#allocation7 + $0x30] sm:$0xff]
    %v624 = vld [vmem:[#allocation7 + $0x38] sm:$0xff]
    %v625 = vlaneseq
    %v626 = vshrl.u32 %v625, 7
    %v627 = vsub.s32 3, %v626
    %v628 = vrot.slane %v85, %v627
    %v630 = vsel %vm301, %v616, 0
    %632 = vmatprep.subr.mxu0 0.0
    %633 = vmatpush1.msra.mxu0 %v617
    %634 = vmatprep.subr.mxu0 0.0
    %635 = vmatpush1.msra.mxu0 %v618
    %636 = vmatprep.subr.mxu0 0.0
    %637 = vmatpush1.msra.mxu0 %v619
    %638 = vmatprep.subr.mxu0 0.0
    %639 = vmatpush1.msra.mxu0 %v620
    %640 = vmatprep.subr.mxu0 0.0
    %641 = vmatpush1.msra.mxu0 %v621
    %642 = vmatprep.subr.mxu0 0.0
    %643 = vmatpush1.msra.mxu0 %v622
    %644 = vmatprep.subr.mxu0 0.0
    %645 = vmatpush1.msra.mxu0 %v623
    %646 = vmatprep.subr.mxu0 0.0
    %647 = vmatpush1.msra.mxu0 %v624
    %648 = vmatprep.subr.mxu0 0.0
    %649 = vmatpush1.msra.mxu0 0.0
    %650 = vmatprep.subr.mxu0 0.0
    %651 = vmatpush1.msra.mxu0 0.0
    %652 = vmatprep.subr.mxu0 0.0
    %653 = vmatpush1.msra.mxu0 0.0
    %654 = vmatprep.subr.mxu0 0.0
    %655 = vmatpush1.msra.mxu0 0.0
    %656 = vmatprep.subr.mxu0 0.0
    %657 = vmatpush1.msra.mxu0 0.0
    %658 = vmatprep.subr.mxu0 0.0
    %659 = vmatpush1.msra.mxu0 0.0
    %660 = vmatprep.subr.mxu0 0.0
    %661 = vmatpush1.msra.mxu0 0.0
    %662 = vmatprep.subr.mxu0 0.0
    %663 = vmatpush1.msra.mxu0 0.0
    %664 = vmatprep.subr.mxu0 0.0
    %665 = vmatpush1.msra.mxu0 0.0
    %666 = vmatprep.subr.mxu0 0.0
    %667 = vmatpush1.msra.mxu0 0.0
    %668 = vmatprep.subr.mxu0 0.0
    %669 = vmatpush1.msra.mxu0 0.0
    %670 = vmatprep.subr.mxu0 0.0
    %671 = vmatpush1.msra.mxu0 0.0
    %672 = vmatprep.subr.mxu0 0.0
    %673 = vmatpush1.msra.mxu0 0.0
    %674 = vmatprep.subr.mxu0 0.0
    %675 = vmatpush1.msra.mxu0 0.0
    %676 = vmatprep.subr.mxu0 0.0
    %677 = vmatpush1.msra.mxu0 0.0
    %678 = vmatprep.subr.mxu0 0.0
    %679 = vmatpush1.msra.mxu0 0.0
    %680 = vmatprep.subr.mxu0 0.0
    %681 = vmatpush1.msra.mxu0 0.0
    %682 = vmatprep.subr.mxu0 0.0
    %683 = vmatpush1.msra.mxu0 0.0
    %684 = vmatprep.subr.mxu0 0.0
    %685 = vmatpush1.msra.mxu0 0.0
    %686 = vmatprep.subr.mxu0 0.0
    %687 = vmatpush1.msra.mxu0 0.0
    %688 = vmatprep.subr.mxu0 0.0
    %689 = vmatpush1.msra.mxu0 0.0
    %690 = vmatprep.subr.mxu0 0.0
    %691 = vmatpush1.msra.mxu0 0.0
    %692 = vmatprep.subr.mxu0 0.0
    %693 = vmatpush1.msra.mxu0 0.0
    %694 = vmatprep.subr.mxu0 0.0
    %695 = vmatpush1.msra.mxu0 0.0
    %696 = vmatprep.mubr.f32.mxu0 0.0
    %697 = vmatmul.mubr.f32.gmra.mrb[0].mxu0 %v630
    %v698 = vpop.f32.mrb[0].mxu0
    %v699 = vadd.f32 %v628, %v698
    %v700 = vpop.f32.mrb[0].mxu0
    %701 = vdwg.mxu0
    %vm702 = vcmp.gt.f32.partialorder %v699, 0.0
    %v703 = vmin.f32 %v699, 0.0
    %v704 = vmul.f32 %v703, 1.442695
    %v705 = vpow.pop %v704
    %v706 = vsub.f32 %v705, 1.0
    %v707 = vsel %vm702, %v699, %v706
    %v708 = vlaneseq
    %v709 = vshrl.u32 %v708, 7
    %v710 = vsub.s32 4, %v709
    %v711 = vrot.slane %v85, %v710
    %v712 = vmul.f32 %v707, %v711
    %v713 = vlaneseq
    %v714 = vshrl.u32 %v713, 7
    %v715 = vsub.s32 5, %v714
    %v716 = vrot.slane %v85, %v715
    %v718 = vsel %vm301, %v712, 0
    %720 = vmatprep.subr.mxu0 0.0
    %721 = vmatpush1.msra.mxu0 %v129
    %722 = vmatprep.subr.mxu0 0.0
    %723 = vmatpush1.msra.mxu0 %v130
    %724 = vmatprep.subr.mxu0 0.0
    %725 = vmatpush1.msra.mxu0 %v131
    %726 = vmatprep.subr.mxu0 0.0
    %727 = vmatpush1.msra.mxu0 %v132
    %728 = vmatprep.subr.mxu0 0.0
    %729 = vmatpush1.msra.mxu0 %v133
    %730 = vmatprep.subr.mxu0 0.0
    %731 = vmatpush1.msra.mxu0 %v134
    %732 = vmatprep.subr.mxu0 0.0
    %733 = vmatpush1.msra.mxu0 %v135
    %734 = vmatprep.subr.mxu0 0.0
    %735 = vmatpush1.msra.mxu0 %v136
    %736 = vmatprep.subr.mxu0 0.0
    %737 = vmatpush1.msra.mxu0 0.0
    %738 = vmatprep.subr.mxu0 0.0
    %739 = vmatpush1.msra.mxu0 0.0
    %740 = vmatprep.subr.mxu0 0.0
    %741 = vmatpush1.msra.mxu0 0.0
    %742 = vmatprep.subr.mxu0 0.0
    %743 = vmatpush1.msra.mxu0 0.0
    %744 = vmatprep.subr.mxu0 0.0
    %745 = vmatpush1.msra.mxu0 0.0
    %746 = vmatprep.subr.mxu0 0.0
    %747 = vmatpush1.msra.mxu0 0.0
    %748 = vmatprep.subr.mxu0 0.0
    %749 = vmatpush1.msra.mxu0 0.0
    %750 = vmatprep.subr.mxu0 0.0
    %751 = vmatpush1.msra.mxu0 0.0
    %752 = vmatprep.subr.mxu0 0.0
    %753 = vmatpush1.msra.mxu0 0.0
    %754 = vmatprep.subr.mxu0 0.0
    %755 = vmatpush1.msra.mxu0 0.0
    %756 = vmatprep.subr.mxu0 0.0
    %757 = vmatpush1.msra.mxu0 0.0
    %758 = vmatprep.subr.mxu0 0.0
    %759 = vmatpush1.msra.mxu0 0.0
    %760 = vmatprep.subr.mxu0 0.0
    %761 = vmatpush1.msra.mxu0 0.0
    %762 = vmatprep.subr.mxu0 0.0
    %763 = vmatpush1.msra.mxu0 0.0
    %764 = vmatprep.subr.mxu0 0.0
    %765 = vmatpush1.msra.mxu0 0.0
    %766 = vmatprep.subr.mxu0 0.0
    %767 = vmatpush1.msra.mxu0 0.0
    %768 = vmatprep.subr.mxu0 0.0
    %769 = vmatpush1.msra.mxu0 0.0
    %770 = vmatprep.subr.mxu0 0.0
    %771 = vmatpush1.msra.mxu0 0.0
    %772 = vmatprep.subr.mxu0 0.0
    %773 = vmatpush1.msra.mxu0 0.0
    %774 = vmatprep.subr.mxu0 0.0
    %775 = vmatpush1.msra.mxu0 0.0
    %776 = vmatprep.subr.mxu0 0.0
    %777 = vmatpush1.msra.mxu0 0.0
    %778 = vmatprep.subr.mxu0 0.0
    %779 = vmatpush1.msra.mxu0 0.0
    %780 = vmatprep.subr.mxu0 0.0
    %781 = vmatpush1.msra.mxu0 0.0
    %782 = vmatprep.subr.mxu0 0.0
    %783 = vmatpush1.msra.mxu0 0.0
    %784 = vmatprep.mubr.f32.mxu0 0.0
    %785 = vmatmul.mubr.f32.gmra.mrb[0].mxu0 %v718
    %v786 = vpop.f32.mrb[0].mxu0
    %v787 = vadd.f32 %v716, %v786
    %v788 = vpop.f32.mrb[0].mxu0
    %789 = vdwg.mxu0
    %790 = vst.msk [vmem:[%s6] sm:$0xff] %vm376, %v787
    // Predicated region
    $region46: #{critic_forward.1} parent=1 // pred_check
      _
    $region47: #{critic_forward.1} parent=1 // pred_check_branch
      %792 = sbr.rel (0) target = $region49
    $region48: #{critic_forward.1} parent=1 // pred_region
      _
    $region49: #{critic_forward.1} parent=1 // pred_fallthru
      _
    // Predicated region
    $region50: #{critic_forward.1} parent=1 // pred_check
      _
    $region51: #{critic_forward.1} parent=1 // pred_check_branch
      %794 = sbr.rel (0) target = $region53
    $region52: #{critic_forward.1} parent=1 // pred_region
      _
    $region53: #{critic_forward.1} parent=1 // pred_fallthru
      _
    %795 = vsyncpa [#allocation3], 1
    %796 = vsyncpa [#allocation5], 1
    %797 = vsyncpa [#allocation8], 1

</llo_original>
